<compile_context>
chip_gen: v7x
topology: tpu7x:2x2x1
jax: 0.10.0
libtpu: 0.0.40
codegen_flags: <defaults>
</compile_context>

<pallas_src>
import math

import jax
import jax.numpy as jnp
from jax.experimental import pallas as pl
from jax.experimental.pallas import tpu as pltpu


_LANE = 128
# Conservative VMEM working-set budget: fits v5e's 16 MiB default scoped VMEM
# (v6e/v7x default to 32 MiB) without needing vmem_limit_bytes overrides.
_VMEM_BUDGET = 12 * 1024 * 1024


def _resident_kernel(x_ref, w_ref, b_ref, o_ref):
    """Single K step: W^T fully resident, no scratch, no branches."""
    o_ref[...] = (
        jnp.dot(x_ref[...], w_ref[...], preferred_element_type=jnp.float32)
        + b_ref[...]
    ).astype(o_ref.dtype)


def _ktiled_kernel(x_ref, w_ref, b_ref, o_ref, acc_ref):
    """Fallback for huge input_dim: accumulate over K tiles in f32 scratch."""
    k = pl.program_id(1)

    @pl.when(k == 0)
    def _():
        acc_ref[...] = jnp.zeros_like(acc_ref)

    acc_ref[...] += jnp.dot(
        x_ref[...], w_ref[...], preferred_element_type=jnp.float32
    )

    @pl.when(k == pl.num_programs(1) - 1)
    def _():
        o_ref[...] = (acc_ref[...] + b_ref[...]).astype(o_ref.dtype)


def classifier_forward(
    x: jax.Array, weight: jax.Array, bias: jax.Array, *, force_pallas: bool = False
) -> jax.Array:
    """Pallas implementation of classifier.forward(): x @ W.T + b.

    x:      (..., input_dim)         (bf16)
    weight: (labels, input_dim)      (bf16)
    bias:   (labels,)                (bf16)
    returns (..., labels) in x.dtype
    """
    orig_shape = x.shape
    K = orig_shape[-1]
    labels = weight.shape[0]
    M = math.prod(orig_shape[:-1]) if len(orig_shape) > 1 else 1
    itemsize = jnp.dtype(x.dtype).itemsize

    # ---- tiny-problem fast path: XLA fusion beats kernel overhead ----------
    if not force_pallas and M * K * itemsize <= 64 * 1024:
        out = (
            jnp.dot(x.astype(jnp.float32), weight.astype(jnp.float32).T)
            + bias.astype(jnp.float32)
        ).astype(x.dtype)
        return out

    # ---- lane-dense padded output width (multiple of 128) ------------------
    n_pad = max(_LANE, pl.cdiv(labels, _LANE) * _LANE)

    x2 = x.reshape(M, K)
    # W^T padded with zeros to (K, n_pad); padded cols contribute 0 and are sliced off.
    w_pad = jnp.zeros((K, n_pad), dtype=weight.dtype).at[:, :labels].set(weight.T)
    # bias as a (1, n_pad) f32 row, added to the f32 dot result.
    b_pad = (
        jnp.zeros((1, n_pad), dtype=jnp.float32)
        .at[0, :labels]
        .set(bias.astype(jnp.float32))
    )

    cost = pl.CostEstimate(
        flops=2 * M * K * labels,
        transcendentals=0,
        bytes_accessed=(
            M * K * itemsize                            # x read (dominant)
            + K * n_pad * jnp.dtype(w_pad.dtype).itemsize   # W^T read once (resident)
            + n_pad * 4                                 # bias read (f32)
            + M * n_pad * itemsize                      # output writeback
        ),
    )

    def fits_resident(tm_):
        x_b = 2 * tm_ * K * itemsize                   # double-buffered x
        w_b = 2 * K * n_pad * jnp.dtype(w_pad.dtype).itemsize
        o_b = 2 * tm_ * n_pad * itemsize
        b_b = 2 * n_pad * 4
        return x_b + w_b + o_b + b_b <= _VMEM_BUDGET

    # ---- preferred path: single K step, W^T resident in VMEM ---------------
    tm = None
    if M <= 512:
        cand = max(16, pl.cdiv(M, 16) * 16)            # bf16 sublane tile is (16,128)
        while cand > 16 and not fits_resident(cand):
            cand = max(16, (cand // 2 // 16) * 16)
        if fits_resident(cand):
            tm = cand
    else:
        for cand in (1024, 512, 256, 128):
            # keep >= 2 row tiles so v7x's two TensorCores both get work
            if pl.cdiv(M, cand) >= 2 and fits_resident(cand):
                tm = cand
                break

    if tm is not None:
        grid = (pl.cdiv(M, tm),)  # no row padding; ragged tail handled by Pallas
        out_full = pl.pallas_call(
            _resident_kernel,
            out_shape=jax.ShapeDtypeStruct((M, n_pad), x.dtype),
            grid_spec=pltpu.PrefetchScalarGridSpec(
                num_scalar_prefetch=0,
                grid=grid,
                in_specs=[
                    pl.BlockSpec((tm, K), lambda i: (i, 0)),     # x row tile (streamed)
                    pl.BlockSpec((K, n_pad), lambda i: (0, 0)),  # W^T (resident)
                    pl.BlockSpec((1, n_pad), lambda i: (0, 0)),  # bias row (resident)
                ],
                out_specs=pl.BlockSpec((tm, n_pad), lambda i: (i, 0)),
            ),
            compiler_params=pltpu.CompilerParams(
                dimension_semantics=("parallel",),
            ),
            cost_estimate=cost,
        )(x2, w_pad, b_pad)
    else:
        # ---- fallback: huge input_dim -> tile the reduction axis -----------
        tk_cands = (4096, 2048, 1024, 512)
        K_pad = pl.cdiv(K, 512) * 512
        if K_pad != K:
            # zero-pad the reduction axis (zeros contribute nothing to the dot).
            x2 = jnp.pad(x2, ((0, 0), (0, K_pad - K)))
            w_pad = jnp.pad(w_pad, ((0, K_pad - K), (0, 0)))

        def fits_ktiled(tm_, tk_):
            x_b = 3 * tm_ * tk_ * itemsize             # pl.Buffered(3) on x
            w_b = 2 * tk_ * n_pad * jnp.dtype(w_pad.dtype).itemsize
            o_b = 2 * tm_ * n_pad * itemsize
            acc = tm_ * n_pad * 4
            return x_b + w_b + o_b + acc + 2 * n_pad * 4 <= _VMEM_BUDGET

        tm, tk = 128, 512
        done = False
        for tm_c in (512, 256, 128):
            for tk_c in tk_cands:
                if K_pad % tk_c == 0 and fits_ktiled(tm_c, tk_c):
                    tm, tk = tm_c, tk_c
                    done = True
                    break
            if done:
                break

        grid = (pl.cdiv(M, tm), K_pad // tk)
        out_full = pl.pallas_call(
            _ktiled_kernel,
            out_shape=jax.ShapeDtypeStruct((M, n_pad), x.dtype),
            grid_spec=pltpu.PrefetchScalarGridSpec(
                num_scalar_prefetch=0,
                grid=grid,
                in_specs=[
                    pl.BlockSpec((tm, tk), lambda i, k: (i, k),
                                 pipeline_mode=pl.Buffered(3)),   # deep-buffer x stream
                    pl.BlockSpec((tk, n_pad), lambda i, k: (k, 0)),
                    pl.BlockSpec((1, n_pad), lambda i, k: (0, 0)),
                ],
                out_specs=pl.BlockSpec((tm, n_pad), lambda i, k: (i, 0)),
                scratch_shapes=[pltpu.VMEM((tm, n_pad), jnp.float32)],
            ),
            compiler_params=pltpu.CompilerParams(
                dimension_semantics=("parallel", "arbitrary"),
            ),
            cost_estimate=cost,
        )(x2, w_pad, b_pad)

    out = out_full[:, :labels]
    return out.reshape(orig_shape[:-1] + (labels,))


if __name__ == "__main__":
    key = jax.random.PRNGKey(0)
    k_x, k_w, k_x2 = jax.random.split(key, 3)
    dtype = jnp.bfloat16

    def ref_forward(x, w, b):
        return (
            jnp.dot(x.astype(jnp.float32), w.astype(jnp.float32).T)
            + b.astype(jnp.float32)
        ).astype(dtype)

    # ---- module-consistent small shape: batch=2, seq=8, input_dim=32, labels=2
    B, S, input_dim, labels = 2, 8, 32, 2
    x = jax.random.normal(k_x, (B, S, input_dim), dtype=jnp.float32).astype(dtype)

    # kaiming_uniform_(a=sqrt(5)) on (labels, input_dim) => U(-1/sqrt(fan_in), 1/sqrt(fan_in))
    bound = 1.0 / math.sqrt(input_dim)
    weight = jax.random.uniform(
        k_w, (labels, input_dim), minval=-bound, maxval=bound, dtype=jnp.float32
    ).astype(dtype)
    bias = jnp.zeros((labels,), dtype=dtype)  # nn.init.zeros_

    ref = ref_forward(x, weight, bias)

    # Force the Pallas kernel (default dispatch would use the tiny-input fast path).
    out = jax.block_until_ready(
        classifier_forward(x, weight, bias, force_pallas=True)
    )
    assert out.shape == (B, S, labels)
    assert out.dtype == dtype
    assert jnp.allclose(out.astype(jnp.float32), ref.astype(jnp.float32),
                        atol=2e-2, rtol=2e-2)

    # Default dispatch (fast path) on the same tiny input.
    out_fast = jax.block_until_ready(classifier_forward(x, weight, bias))
    assert jnp.allclose(out_fast.astype(jnp.float32), ref.astype(jnp.float32),
                        atol=2e-2, rtol=2e-2)

    # ---- medium shape exercising 2 row tiles + ragged (un-padded) tail -----
    B2, S2, K2 = 4, 250, 512  # M = 1000 -> tm = 512, grid = (2,), ragged last block
    x_big = jax.random.normal(k_x2, (B2, S2, K2), dtype=jnp.float32).astype(dtype)
    bound2 = 1.0 / math.sqrt(K2)
    w_big = jax.random.uniform(
        k_w, (labels, K2), minval=-bound2, maxval=bound2, dtype=jnp.float32
    ).astype(dtype)
    b_big = jnp.zeros((labels,), dtype=dtype)

    out_big = jax.block_until_ready(classifier_forward(x_big, w_big, b_big))
    ref_big = ref_forward(x_big, w_big, b_big)
    assert out_big.shape == (B2, S2, labels)
    assert jnp.allclose(out_big.astype(jnp.float32), ref_big.astype(jnp.float32),
                        atol=2e-2, rtol=2e-2)

    print("KERNEL_OK")
</pallas_src>

<mosaic_0001>
module attributes {stable_mosaic.version = 11 : i64} {
  func.func @_resident_kernel(%arg0: i32, %arg1: memref<16x32xbf16, #tpu.memory_space<vmem>>, %arg2: memref<32x128xbf16, #tpu.memory_space<vmem>>, %arg3: memref<1x128xf32, #tpu.memory_space<vmem>>, %arg4: memref<16x128xbf16, #tpu.memory_space<vmem>>) attributes {dimension_semantics = [#tpu.dimension_semantics<parallel>], iteration_bounds = array<i64: 1>, scalar_prefetch = 0 : i64, scratch_operands = 0 : i64, tpu.core_type = #tpu.core_type<tc>, window_params = [{transform_indices = @transform_0, window_bounds = array<i64: 16, 32>}, {pipeline_mode = #tpu.pipeline_mode<synchronous>, transform_indices = @transform_1, window_bounds = array<i64: 32, 128>}, {pipeline_mode = #tpu.pipeline_mode<synchronous>, transform_indices = @transform_2, window_bounds = array<i64: 1, 128>}, {transform_indices = @transform_3, window_bounds = array<i64: 16, 128>}]} {
    %c0 = arith.constant 0 : index
    %c0_0 = arith.constant 0 : index
    %0 = vector.load %arg1[%c0, %c0_0] : memref<16x32xbf16, #tpu.memory_space<vmem>>, vector<16x32xbf16>
    %c0_1 = arith.constant 0 : index
    %c0_2 = arith.constant 0 : index
    %1 = vector.load %arg2[%c0_1, %c0_2] : memref<32x128xbf16, #tpu.memory_space<vmem>>, vector<32x128xbf16>
    %cst = arith.constant dense<0.000000e+00> : vector<16x128xf32>
    %2 = tpu.matmul %0, %1, %cst {dimension_numbers = #tpu.dot_dimension_numbers<[1], [0], [0], [1], [0, 0, 1, 1], [], []>} : vector<16x32xbf16>, vector<32x128xbf16>, vector<16x128xf32> -> vector<16x128xf32>
    %c0_3 = arith.constant 0 : index
    %c0_4 = arith.constant 0 : index
    %3 = vector.load %arg3[%c0_3, %c0_4] : memref<1x128xf32, #tpu.memory_space<vmem>>, vector<1x128xf32>
    %4 = vector.broadcast %3 : vector<1x128xf32> to vector<16x128xf32>
    %5 = arith.addf %2, %4 : vector<16x128xf32>
    %6 = arith.truncf %5 : vector<16x128xf32> to vector<16x128xbf16>
    %c0_5 = arith.constant 0 : index
    %c0_6 = arith.constant 0 : index
    %7 = vector.load %arg4[%c0_5, %c0_6] : memref<16x128xbf16, #tpu.memory_space<vmem>>, vector<16x128xbf16>
    tpu.vector_store %arg4[%c0_5, %c0_6], %6 {strides = array<i32>} : memref<16x128xbf16, #tpu.memory_space<vmem>>, vector<16x128xbf16>,
    return
  }
  func.func @transform_0(%arg0: i32) -> (i32, i32) {
    %c0_i32 = arith.constant 0 : i32
    %c0_i32_0 = arith.constant 0 : i32
    return %arg0, %c0_i32 : i32, i32
  }
  func.func @transform_1(%arg0: i32) -> (i32, i32) {
    %c0_i32 = arith.constant 0 : i32
    %c0_i32_0 = arith.constant 0 : i32
    %c0_i32_1 = arith.constant 0 : i32
    return %c0_i32, %c0_i32_0 : i32, i32
  }
  func.func @transform_2(%arg0: i32) -> (i32, i32) {
    %c0_i32 = arith.constant 0 : i32
    %c0_i32_0 = arith.constant 0 : i32
    %c0_i32_1 = arith.constant 0 : i32
    return %c0_i32, %c0_i32_0 : i32, i32
  }
  func.func @transform_3(%arg0: i32) -> (i32, i32) {
    %c0_i32 = arith.constant 0 : i32
    %c0_i32_0 = arith.constant 0 : i32
    return %arg0, %c0_i32 : i32, i32
  }
}

</mosaic_0001>

<llo_original>
// kernel: tpu_custom_call.1
$region0: #{tpu_custom_call.1}
  #allocation0 [shape = 'u32[]', space=smem, size = 0x4, offset = 0x4, fixed_abs, tag = 'smem constant byte address 0x4 - core index']
  #allocation1 [shape = 'u32[144,128]{1,0:T(1,128)}', space=vmem, size = 0x12000, scoped, tag = 'internal scratch']
  %s0 = inlined_call_operand.hbm [shape: bf16[16,32], index: 0, kind: input, shape index: {}]
  %s1 = inlined_call_operand.hbm [shape: bf16[32,128], index: 1, kind: input, shape index: {}]
  %s2 = inlined_call_operand.vmem [shape: f32[1,128], index: 2, kind: input, shape index: {}]
  %s3 = inlined_call_operand.hbm [shape: bf16[16,128], index: 3, kind: output, shape index: {}]
  %s4 = sld [smem:[#allocation0]]
  $region30: #{tpu_custom_call.1} parent=0
    _
  %s6 = ssub.s32 1, %s4
  %s7 = scalar_select 0, %s6, %s4
  $region1: #{tpu_custom_call.1} parent=0
    #allocation2 [shape = 'u8[4096]{0}', space=vmem, size = 0x1000, scoped, tag = 'input window, operand 0, single buffered']
    #allocation3 [shape = 's32[1]{0}', space=sflag, size = 0x4, scoped, tag = 'scoped memory for tpu_custom_call.1']
    #allocation4 [shape = 's32[1]{0}', space=sflag, size = 0x4, scoped, tag = 'scoped memory for tpu_custom_call.1']
    #allocation5 [shape = 'u8[8192]{0}', space=vmem, size = 0x2000, scoped, tag = 'input window, operand 1, single buffered']
    #allocation6 [shape = 's32[1]{0}', space=sflag, size = 0x4, scoped, tag = 'scoped memory for tpu_custom_call.1']
    #allocation7 [shape = 'u8[4096]{0}', space=vmem, size = 0x1000, scoped, tag = 'output window, operand 0, single buffered']
    %8 = vsyncpa [#allocation3], 0
    %9 = vsyncpa [#allocation6], 0
    %10 = vsyncpa [#allocation4], 0
    // Predicated region
    $region2: #{tpu_custom_call.1} parent=1 // pred_check
      _
    $region3: #{tpu_custom_call.1} parent=1 // pred_check_branch
      %12 = sbr.rel (0) target = $region5
    $region4: #{tpu_custom_call.1} parent=1 // pred_region
      %s14 = ssub.s32 128, 128
      %15 = vsyncadd [#allocation3], %s14
      %s16 = sshll.u32 [#allocation2], 4
      %s17 = int_to_ptr.vmem [resolvable:$true] %s16
      %22 = dma.hbm_to_vmem [thread:$0]  %s0, 128, %s17, [#allocation3], 64, 64, 4
    $region5: #{tpu_custom_call.1} parent=1 // pred_fallthru
      _
    // Predicated region
    $region6: #{tpu_custom_call.1} parent=1 // pred_check
      _
    $region7: #{tpu_custom_call.1} parent=1 // pred_check_branch
      %24 = sbr.rel (0) target = $region9
    $region8: #{tpu_custom_call.1} parent=1 // pred_region
      %s26 = ssub.s32 256, 256
      %27 = vsyncadd [#allocation6], %s26
      %s28 = sshll.u32 [#allocation5], 4
      %s29 = int_to_ptr.vmem [resolvable:$true] %s28
      %34 = dma.hbm_to_vmem [thread:$0]  %s1, 256, %s29, [#allocation6], 64, 64, 4
    $region9: #{tpu_custom_call.1} parent=1 // pred_fallthru
      _
    // Predicated region
    $region10: #{tpu_custom_call.1} parent=1 // pred_check
      _
    $region11: #{tpu_custom_call.1} parent=1 // pred_check_branch
      %36 = sbr.rel (0) target = $region13
    $region12: #{tpu_custom_call.1} parent=1 // pred_region
      _
    $region13: #{tpu_custom_call.1} parent=1 // pred_fallthru
      _
    // Predicated region
    $region14: #{tpu_custom_call.1} parent=1 // pred_check
      _
    $region15: #{tpu_custom_call.1} parent=1 // pred_check_branch
      %38 = sbr.rel (0) target = $region17
    $region16: #{tpu_custom_call.1} parent=1 // pred_region
      %39 = dma.done [#allocation3], 128
    $region17: #{tpu_custom_call.1} parent=1 // pred_fallthru
      _
    // Predicated region
    $region18: #{tpu_custom_call.1} parent=1 // pred_check
      _
    $region19: #{tpu_custom_call.1} parent=1 // pred_check_branch
      %41 = sbr.rel (0) target = $region21
    $region20: #{tpu_custom_call.1} parent=1 // pred_region
      %42 = dma.done [#allocation6], 256
    $region21: #{tpu_custom_call.1} parent=1 // pred_fallthru
      _
    %v44 = vld [vmem:[#allocation2] sm:$0xf]
    %v45 = vld [vmem:[#allocation2 + $0x4] sm:$0xf]
    %v46 = vld [vmem:[#allocation5] sm:$0xf]
    %v47 = vld [vmem:[#allocation5 + $0x4] sm:$0xf]
    %v48 = vld [vmem:[#allocation5 + $0x8] sm:$0xf]
    %v49 = vld [vmem:[#allocation5 + $0xc] sm:$0xf]
    %v50 = vld [vmem:[%s2] sm:$0x1]
    %v52 = vlaneseq
    %v53 = vshrl.u32 %v52, 7
    %v54 = vsub.s32 0, %v53
    %v55 = vrot.slane %v50, %v54
    %v59 = vunpack.c.l.b16 %v44
    %v60 = vunpack.c.l.b16 %v45
    %v61 = vpack.c.b16 %v60, %v59
    %v66 = vunpack.c.l.b16 %v46
    %v67 = vunpack.c.l.b16 %v47
    %v68 = vunpack.c.l.b16 %v48
    %v69 = vunpack.c.l.b16 %v49
    %v70 = vpack.c.b16 %v67, %v66
    %v71 = vpack.c.b16 %v69, %v68
    %vm74 = vcmask 261120
    %v76 = vsel %vm74, %v61, 0
    %78 = vmatprep.subr.bf16.mxu0 0
    %79 = vmatpush1.bf16.msra.mxu0 %v70
    %80 = vmatprep.subr.bf16.mxu0 0
    %81 = vmatpush1.bf16.msra.mxu0 %v71
    %82 = vmatprep.subr.bf16.mxu0 0
    %83 = vmatpush1.bf16.msra.mxu0 0
    %84 = vmatprep.subr.bf16.mxu0 0
    %85 = vmatpush1.bf16.msra.mxu0 0
    %86 = vmatprep.subr.bf16.mxu0 0
    %87 = vmatpush1.bf16.msra.mxu0 0
    %88 = vmatprep.subr.bf16.mxu0 0
    %89 = vmatpush1.bf16.msra.mxu0 0
    %90 = vmatprep.subr.bf16.mxu0 0
    %91 = vmatpush1.bf16.msra.mxu0 0
    %92 = vmatprep.subr.bf16.mxu0 0
    %93 = vmatpush1.bf16.msra.mxu0 0
    %94 = vmatprep.subr.bf16.mxu0 0
    %95 = vmatpush1.bf16.msra.mxu0 0
    %96 = vmatprep.subr.bf16.mxu0 0
    %97 = vmatpush1.bf16.msra.mxu0 0
    %98 = vmatprep.subr.bf16.mxu0 0
    %99 = vmatpush1.bf16.msra.mxu0 0
    %100 = vmatprep.subr.bf16.mxu0 0
    %101 = vmatpush1.bf16.msra.mxu0 0
    %102 = vmatprep.subr.bf16.mxu0 0
    %103 = vmatpush1.bf16.msra.mxu0 0
    %104 = vmatprep.subr.bf16.mxu0 0
    %105 = vmatpush1.bf16.msra.mxu0 0
    %106 = vmatprep.subr.bf16.mxu0 0
    %107 = vmatpush1.bf16.msra.mxu0 0
    %108 = vmatprep.subr.bf16.mxu0 0
    %109 = vmatpush1.bf16.msra.mxu0 0
    %110 = vmatprep.mubr.bf16.mxu0 0
    %111 = vmatmul.mubr.bf16.gmra.mrb[0].mxu0 %v76
    %v112 = vpop.f32.mrb[0].mxu0
    %v113 = vadd.f32 %v55, %v112
    %v114 = vpop.f32.mrb[0].mxu0
    %v115 = vpop.f32.mrb[0].mxu0
    %v116 = vadd.f32 %v55, %v115
    %v117 = vpop.f32.mrb[0].mxu0
    %118 = vdwg.mxu0
    %v119 = vpack.c.bf16 %v116, %v113
    %v121 = vunpack.c.l.b16 %v119
    %v122 = vunpack.c.h.b16 %v119
    %v123 = vpack.c.b16 %v121, %v121
    %v124 = vpack.c.b16 %v122, %v122
    %127 = vst [vmem:[#allocation7] sm:$0xf] %v123
    %128 = vst [vmem:[#allocation7 + $0x4] sm:$0xf] %v124
    // Predicated region
    $region22: #{tpu_custom_call.1} parent=1 // pred_check
      _
    $region23: #{tpu_custom_call.1} parent=1 // pred_check_branch
      %130 = sbr.rel (0) target = $region25
    $region24: #{tpu_custom_call.1} parent=1 // pred_region
      %s132 = ssub.s32 128, 128
      %133 = vsyncadd [#allocation4], %s132
      %s134 = sshll.u32 [#allocation7], 4
      %s135 = int_to_ptr.vmem [resolvable:$true] %s134
      %140 = dma.vmem_to_hbm [thread:$0]  %s135, 128, %s3, [#allocation4], 64, 64, 4
    $region25: #{tpu_custom_call.1} parent=1 // pred_fallthru
      _
    // Predicated region
    $region26: #{tpu_custom_call.1} parent=1 // pred_check
      _
    $region27: #{tpu_custom_call.1} parent=1 // pred_check_branch
      %142 = sbr.rel (0) target = $region29
    $region28: #{tpu_custom_call.1} parent=1 // pred_region
      %143 = dma.done [#allocation4], 128
    $region29: #{tpu_custom_call.1} parent=1 // pred_fallthru
      _
    %144 = vsyncpa [#allocation3], 1
    %145 = vsyncpa [#allocation6], 1
    %146 = vsyncpa [#allocation4], 1

</llo_original>
